<compile_context>
chip_gen: v5e
topology: v5e:2x2
jax: 0.10.0
libtpu: 0.0.40
codegen_flags: <defaults>
</compile_context>

<pallas_src>
import functools

import jax
import jax.numpy as jnp
from jax.experimental import pallas as pl
from jax.experimental.pallas import tpu as pltpu


# ----------------------------- Pallas kernel ------------------------------ #

def _nn_argmax_kernel(tn, db_ref, qT_ref, idx_ref, best_ref):
    """Grid = (query tiles [parallel], db tiles [arbitrary / reduction]).

    db_ref  : (tn, D+1)  database tile (last column = -0.5*||d||^2 bias)
    qT_ref  : (D+1, tm)  transposed query tile (last row = 1.0), lane-dense
    idx_ref : (1, tm)    running argmax index (output, resident over db tiles)
    best_ref: (1, tm)    running best score (VMEM scratch)
    """
    j = pl.program_id(1)

    @pl.when(j == 0)
    def _():
        best_ref[...] = jnp.full(best_ref.shape, -jnp.inf, best_ref.dtype)
        idx_ref[...] = jnp.zeros_like(idx_ref)

    # s[n, m] = d_n . q_m - 0.5*||d_n||^2   (argmax_n s == nearest neighbour)
    s = jnp.dot(db_ref[...], qT_ref[...],
                preferred_element_type=jnp.float32)              # (tn, tm)

    tile_best = jnp.max(s, axis=0, keepdims=True)                # (1, tm)
    row = jax.lax.broadcasted_iota(jnp.int32, s.shape, 0) + j * tn
    tile_idx = jnp.min(
        jnp.where(s >= tile_best, row, jnp.iinfo(jnp.int32).max),
        axis=0, keepdims=True)                                   # (1, tm)

    better = tile_best > best_ref[...]   # strict >: earlier tile wins ties
    idx_ref[...] = jnp.where(better, tile_idx, idx_ref[...])
    best_ref[...] = jnp.where(better, tile_best, best_ref[...])


def _round_up(x, m):
    return (x + m - 1) // m * m


def nearest_indices(q, db_aug, n_real, *, tn, tm=256):
    """Index (into the un-padded database) of the nearest db row per query.

    q      : (M, D) float queries.
    db_aug : (n_pad, D+1) augmented / tile-padded database built in __init__.
    n_real : number of real (non-padding) database rows; n_pad % tn == 0.
    """
    M, D = q.shape
    n_pad, d_aug = db_aug.shape
    assert d_aug == D + 1 and n_pad % tn == 0

    # Transposed, bias-augmented queries: lane dim = M (lane-dense in VMEM).
    qT_aug = jnp.concatenate(
        [q.astype(jnp.float32).T, jnp.ones((1, M), jnp.float32)], axis=0)

    tm = max(128, min(tm, _round_up(M, 128)))
    m_pad = _round_up(M, tm)
    if m_pad > M:
        pad_q = jnp.zeros((D + 1, m_pad - M), jnp.float32).at[-1, :].set(1.0)
        qT_aug = jnp.concatenate([qT_aug, pad_q], axis=1)

    idx = pl.pallas_call(
        functools.partial(_nn_argmax_kernel, tn),
        out_shape=jax.ShapeDtypeStruct((1, m_pad), jnp.int32),
        grid_spec=pltpu.PrefetchScalarGridSpec(
            num_scalar_prefetch=0,
            grid=(m_pad // tm, n_pad // tn),          # (query tiles, db tiles)
            in_specs=[
                pl.BlockSpec((tn, D + 1), lambda i, j: (j, 0)),   # db tile
                pl.BlockSpec((D + 1, tm), lambda i, j: (0, i)),   # query tile
            ],
            out_specs=pl.BlockSpec((1, tm), lambda i, j: (0, i)),  # lane-dense
            scratch_shapes=[pltpu.VMEM((1, tm), jnp.float32)],     # running max
        ),
        compiler_params=pltpu.CompilerParams(
            dimension_semantics=("parallel", "arbitrary"),
            vmem_limit_bytes=32 * 1024 * 1024),
    )(db_aug, qT_aug)

    del n_real  # padded db rows can never win (bias -1e30); no masking needed
    return idx[0, :M]


# ------------------------------- JAX glue --------------------------------- #

def circular_unfold(x, k):
    """x: (B, C, H, W) -> (B, H*W, C*k*k); matches F.pad(circular)+F.unfold
    feature ordering (c outer, then kernel row, then kernel col)."""
    pad = k // 2
    B, C, H, W = x.shape
    patches = [
        jnp.roll(x, shift=(-dh, -dw), axis=(2, 3))
        for dh in range(-pad, pad + 1)
        for dw in range(-pad, pad + 1)
    ]
    stacked = jnp.stack(patches, axis=2)             # (B, C, k*k, H, W)
    feat = stacked.reshape(B, C * k * k, H * W)      # (B, C*k*k, L)
    return jnp.transpose(feat, (0, 2, 1))            # (B, L, C*k*k)


class NearestNeighborPallas:
    """JAX/Pallas port of the PyTorch NearestNeighbor module."""

    def __init__(self, recording, walls, top_kernel_size, *, tn=1024, tm=256):
        assert recording.ndim == 4                   # (B_rec, C_rec, H, W)
        self.k = top_kernel_size
        self.walls = walls[None, None]               # (1, 1, H, W)
        self.tm = tm

        b_rec = recording.shape[0]
        rec = jnp.concatenate(
            [recording,
             jnp.broadcast_to(self.walls, (b_rec, 1) + walls.shape)], axis=1)
        b_rec, c, h, w = rec.shape
        self.C, self.H, self.W = c, h, w

        unfolded = circular_unfold(rec, self.k).reshape(
            b_rec * h * w, c * self.k ** 2)          # (B_rec*H*W, C*K*K)
        db = unfolded[:-h * w].astype(jnp.float32)   # database (N, D)
        targets = unfolded[h * w:]                   # "next frame" patches
        middle = self.k ** 2 // 2
        self.targets_mid = targets.reshape(-1, c, self.k ** 2)[:, :, middle]  # (N, C)

        # Bias-augmented, tile-padded database, built once:
        #   db_aug[n] = [ d_n , -0.5*||d_n||^2 ];  padding rows get bias -1e30
        # so they can never win the argmax.
        n_real, d_feat = db.shape
        db_sqnorm = jnp.sum(db * db, axis=-1)
        db_aug = jnp.concatenate([db, (-0.5 * db_sqnorm)[:, None]], axis=1)
        self.tn = max(256, min(tn, _round_up(n_real, 256)))   # 256-aligned tiles
        n_pad = _round_up(n_real, self.tn)
        if n_pad > n_real:
            pad = jnp.zeros((n_pad - n_real, d_feat + 1),
                            jnp.float32).at[:, -1].set(-1e30)
            db_aug = jnp.concatenate([db_aug, pad], axis=0)
        self.db_aug = db_aug
        self.n_real = n_real

    def forward_single(self, x, y=None):
        b, c, h, w = x.shape
        q = circular_unfold(x, self.k).reshape(b * h * w, c * self.k ** 2)
        idx = nearest_indices(q, self.db_aug, self.n_real,
                              tn=self.tn, tm=self.tm)           # (B*H*W,)
        value = self.targets_mid[idx]                           # gather (glue)
        value = value.reshape(b, h * w, c).transpose(0, 2, 1).reshape(b, c, h, w)
        loss = jnp.mean((value - y) ** 2) if y is not None else None
        return value, loss

    def __call__(self, x, walls=None):
        b, depth, _, h, w = x.shape
        wll = self.walls if walls is None else walls[None, None]
        w_rep = jnp.broadcast_to(wll[None], (b, depth, 1, h, w))
        x = jnp.concatenate([x, w_rep], axis=2)                 # add walls channel

        current = x[:, 0]
        steps = [current[:, None]]
        losses = []
        for i in range(1, depth):
            current, loss = self.forward_single(current, x[:, i])
            steps.append(current[:, None])
            losses.append(loss)
        all_steps = jnp.concatenate(steps, axis=1)
        all_losses = jnp.mean(jnp.stack(losses)) if losses else None
        return all_steps[:, :, :-1], all_losses                 # drop walls channel


# --------------------------------- main ----------------------------------- #

if __name__ == "__main__":
    key = jax.random.PRNGKey(0)
    k1, k2, k3 = jax.random.split(key, 3)

    H = W = 8
    C_REC = 3          # data channels (+1 walls channel -> C = 4, D = 4*9 = 36)
    K = 3
    B_REC = 5          # recording frames -> database N = (B_REC - 1)*H*W = 256
    BATCH, DEPTH = 2, 3

    recording = jax.random.normal(k1, (B_REC, C_REC, H, W), dtype=jnp.float32)
    walls = (jax.random.uniform(k2, (H, W)) > 0.7).astype(jnp.float32)
    x = jax.random.normal(k3, (BATCH, DEPTH, C_REC, H, W), dtype=jnp.float32)

    model = NearestNeighborPallas(recording, walls, K)
    all_steps, all_losses = model(x)
    jax.block_until_ready(all_steps)
    jax.block_until_ready(all_losses)

    assert all_steps.shape == (BATCH, DEPTH, C_REC, H, W)
    assert all_losses.shape == ()
    assert bool(jnp.isfinite(all_losses))
    print("KERNEL_OK")
</pallas_src>

<mosaic_0001>
module attributes {stable_mosaic.version = 11 : i64} {
  func.func @_nn_argmax_kernel(%arg0: i32, %arg1: i32, %arg2: memref<256x37xf32, #tpu.memory_space<vmem>>, %arg3: memref<37x128xf32, #tpu.memory_space<vmem>>, %arg4: memref<1x128xi32, #tpu.memory_space<vmem>>, %arg5: memref<1x128xf32, #tpu.memory_space<vmem>>) attributes {dimension_semantics = [#tpu.dimension_semantics<parallel>, #tpu.dimension_semantics<arbitrary>], iteration_bounds = array<i64: 1, 1>, scalar_prefetch = 0 : i64, scratch_operands = 1 : i64, tpu.core_type = #tpu.core_type<tc>, window_params = [{transform_indices = @transform_0, window_bounds = array<i64: 256, 37>}, {transform_indices = @transform_1, window_bounds = array<i64: 37, 128>}, {transform_indices = @transform_2, window_bounds = array<i64: 1, 128>}]} {
    %c0_i32 = arith.constant 0 : i32
    %0 = arith.cmpi eq, %arg1, %c0_i32 : i32
    %1 = arith.extui %0 : i1 to i32
    %c0_i32_0 = arith.constant 0 : i32
    %2 = arith.cmpi ne, %1, %c0_i32_0 : i32
    scf.if %2 {
      %cst_16 = arith.constant 0xFF800000 : f32
      %26 = vector.broadcast %cst_16 : f32 to vector<1x128xf32>
      %c0_17 = arith.constant 0 : index
      %c0_18 = arith.constant 0 : index
      %27 = vector.load %arg5[%c0_17, %c0_18] : memref<1x128xf32, #tpu.memory_space<vmem>>, vector<1x128xf32>
      tpu.vector_store %arg5[%c0_17, %c0_18], %26 {strides = array<i32>} : memref<1x128xf32, #tpu.memory_space<vmem>>, vector<1x128xf32>,
      %c0_i32_19 = arith.constant 0 : i32
      %28 = vector.broadcast %c0_i32_19 : i32 to vector<1x128xi32>
      %c0_20 = arith.constant 0 : index
      %c0_21 = arith.constant 0 : index
      %29 = vector.load %arg4[%c0_20, %c0_21] : memref<1x128xi32, #tpu.memory_space<vmem>>, vector<1x128xi32>
      tpu.vector_store %arg4[%c0_20, %c0_21], %28 {strides = array<i32>} : memref<1x128xi32, #tpu.memory_space<vmem>>, vector<1x128xi32>,
    } else {
    }
    %c0 = arith.constant 0 : index
    %c0_1 = arith.constant 0 : index
    %3 = vector.load %arg2[%c0, %c0_1] : memref<256x37xf32, #tpu.memory_space<vmem>>, vector<256x37xf32>
    %c0_2 = arith.constant 0 : index
    %c0_3 = arith.constant 0 : index
    %4 = vector.load %arg3[%c0_2, %c0_3] : memref<37x128xf32, #tpu.memory_space<vmem>>, vector<37x128xf32>
    %cst = arith.constant dense<0.000000e+00> : vector<256x128xf32>
    %5 = tpu.matmul %3, %4, %cst {dimension_numbers = #tpu.dot_dimension_numbers<[1], [0], [0], [1], [0, 0, 1, 1], [], []>} : vector<256x37xf32>, vector<37x128xf32>, vector<256x128xf32> -> vector<256x128xf32>
    %cst_4 = arith.constant dense<0xFF800000> : vector<128xf32>
    %6 = vector.multi_reduction <maximumf>, %5, %cst_4 [0] : vector<256x128xf32> to vector<128xf32>
    %7 = vector.shape_cast %6 : vector<128xf32> to vector<1x128xf32>
    %8 = tpu.iota {dimensions = array<i32: 0>} : vector<256x128xi32>
    %c256_i32 = arith.constant 256 : i32
    %9 = arith.muli %arg1, %c256_i32 : i32
    %10 = vector.broadcast %9 : i32 to vector<256x128xi32>
    %11 = arith.addi %8, %10 : vector<256x128xi32>
    %12 = vector.broadcast %7 : vector<1x128xf32> to vector<256x128xf32>
    %13 = arith.cmpf oge, %5, %12 : vector<256x128xf32>
    %c2147483647_i32 = arith.constant 2147483647 : i32
    %14 = vector.broadcast %c2147483647_i32 : i32 to vector<256x128xi32>
    %15 = arith.select %13, %11, %14 : vector<256x128xi1>, vector<256x128xi32>
    %cst_5 = arith.constant dense<2147483647> : vector<128xi32>
    %16 = vector.multi_reduction <minsi>, %15, %cst_5 [0] : vector<256x128xi32> to vector<128xi32>
    %17 = vector.shape_cast %16 : vector<128xi32> to vector<1x128xi32>
    %c0_6 = arith.constant 0 : index
    %c0_7 = arith.constant 0 : index
    %18 = vector.load %arg5[%c0_6, %c0_7] : memref<1x128xf32, #tpu.memory_space<vmem>>, vector<1x128xf32>
    %19 = arith.cmpf ogt, %7, %18 : vector<1x128xf32>
    %c0_8 = arith.constant 0 : index
    %c0_9 = arith.constant 0 : index
    %20 = vector.load %arg4[%c0_8, %c0_9] : memref<1x128xi32, #tpu.memory_space<vmem>>, vector<1x128xi32>
    %21 = arith.select %19, %17, %20 : vector<1x128xi1>, vector<1x128xi32>
    %c0_10 = arith.constant 0 : index
    %c0_11 = arith.constant 0 : index
    %22 = vector.load %arg4[%c0_10, %c0_11] : memref<1x128xi32, #tpu.memory_space<vmem>>, vector<1x128xi32>
    tpu.vector_store %arg4[%c0_10, %c0_11], %21 {strides = array<i32>} : memref<1x128xi32, #tpu.memory_space<vmem>>, vector<1x128xi32>,
    %c0_12 = arith.constant 0 : index
    %c0_13 = arith.constant 0 : index
    %23 = vector.load %arg5[%c0_12, %c0_13] : memref<1x128xf32, #tpu.memory_space<vmem>>, vector<1x128xf32>
    %24 = arith.select %19, %7, %23 : vector<1x128xi1>, vector<1x128xf32>
    %c0_14 = arith.constant 0 : index
    %c0_15 = arith.constant 0 : index
    %25 = vector.load %arg5[%c0_14, %c0_15] : memref<1x128xf32, #tpu.memory_space<vmem>>, vector<1x128xf32>
    tpu.vector_store %arg5[%c0_14, %c0_15], %24 {strides = array<i32>} : memref<1x128xf32, #tpu.memory_space<vmem>>, vector<1x128xf32>,
    return
  }
  func.func @transform_0(%arg0: i32, %arg1: i32) -> (i32, i32) {
    %c0_i32 = arith.constant 0 : i32
    %c0_i32_0 = arith.constant 0 : i32
    return %arg1, %c0_i32 : i32, i32
  }
  func.func @transform_1(%arg0: i32, %arg1: i32) -> (i32, i32) {
    %c0_i32 = arith.constant 0 : i32
    %c0_i32_0 = arith.constant 0 : i32
    return %c0_i32, %arg0 : i32, i32
  }
  func.func @transform_2(%arg0: i32, %arg1: i32) -> (i32, i32) {
    %c0_i32 = arith.constant 0 : i32
    %c0_i32_0 = arith.constant 0 : i32
    return %c0_i32, %arg0 : i32, i32
  }
}

</mosaic_0001>

<llo_original>
// kernel: tpu_custom_call.1
$region0: #{tpu_custom_call.1}
  #allocation0 [shape = 'u32[]', space=smem, size = 0x4, offset = 0x4, fixed_abs, tag = 'smem constant byte address 0x4 - core index']
  #allocation1 [shape = 'u32[72,128]{1,0:T(1,128)}', space=vmem, size = 0x9000, scoped, tag = 'internal scratch']
  #allocation2 [shape = 'f32[1,128]{1,0:T(1,128)}', space=vmem, size = 0x200, scoped, tag = 'scratch operand']
  %s0 = inlined_call_operand.vmem [shape: f32[256,37], index: 0, kind: input, shape index: {}]
  %s1 = inlined_call_operand.vmem [shape: f32[37,128], index: 1, kind: input, shape index: {}]
  %s2 = inlined_call_operand.hbm [shape: s32[1,128], index: 2, kind: output, shape index: {}]
  %s3 = sld [smem:[#allocation0]]
  $region22: #{tpu_custom_call.1} parent=0
    _
  %s5 = ssub.s32 1, %s3
  %s6 = scalar_select 0, %s5, %s3
  $region1: #{tpu_custom_call.1} parent=0
    #allocation3 [shape = 'u8[512]{0}', space=vmem, size = 0x400, scoped, tag = 'output window, operand 0, single buffered']
    #allocation4 [shape = 's32[1]{0}', space=sflag, size = 0x4, scoped, tag = 'scoped memory for tpu_custom_call.1']
    %7 = vsyncpa [#allocation4], 0
    // Predicated region
    $region2: #{tpu_custom_call.1} parent=1 // pred_check
      _
    $region3: #{tpu_custom_call.1} parent=1 // pred_check_branch
      %9 = sbr.rel (0) target = $region5
    $region4: #{tpu_custom_call.1} parent=1 // pred_region
      _
    $region5: #{tpu_custom_call.1} parent=1 // pred_fallthru
      _
    // Predicated region
    $region6: #{tpu_custom_call.1} parent=1 // pred_check
      _
    $region7: #{tpu_custom_call.1} parent=1 // pred_check_branch
      %11 = sbr.rel (0) target = $region9
    $region8: #{tpu_custom_call.1} parent=1 // pred_region
      _
    $region9: #{tpu_custom_call.1} parent=1 // pred_fallthru
      _
    %p12 = scmp.eq.s32.totalorder 0, 0
    // Predicated region
    $region10: #{tpu_custom_call.1} parent=1 // pred_check
      %p13 = pneg %p12
    $region11: #{tpu_custom_call.1} parent=1 // pred_check_branch
      %15 = sbr.rel (%p13) target = $region13
    $region12: #{tpu_custom_call.1} parent=1 // pred_region
      %16 = vst [vmem:[#allocation2] sm:$0x1] -inf
      %17 = vst [vmem:[#allocation3] sm:$0x1] 0
    $region13: #{tpu_custom_call.1} parent=1 // pred_fallthru
      _
    %v18 = vld [vmem:[%s0] sm:$0xff]
    %v19 = vld [vmem:[%s0 + $0x8] sm:$0xff]
    %v20 = vld [vmem:[%s0 + $0x10] sm:$0xff]
    %v21 = vld [vmem:[%s0 + $0x18] sm:$0xff]
    %v22 = vld [vmem:[%s0 + $0x20] sm:$0xff]
    %v23 = vld [vmem:[%s0 + $0x28] sm:$0xff]
    %v24 = vld [vmem:[%s0 + $0x30] sm:$0xff]
    %v25 = vld [vmem:[%s0 + $0x38] sm:$0xff]
    %v26 = vld [vmem:[%s0 + $0x40] sm:$0xff]
    %v27 = vld [vmem:[%s0 + $0x48] sm:$0xff]
    %v28 = vld [vmem:[%s0 + $0x50] sm:$0xff]
    %v29 = vld [vmem:[%s0 + $0x58] sm:$0xff]
    %v30 = vld [vmem:[%s0 + $0x60] sm:$0xff]
    %v31 = vld [vmem:[%s0 + $0x68] sm:$0xff]
    %v32 = vld [vmem:[%s0 + $0x70] sm:$0xff]
    %v33 = vld [vmem:[%s0 + $0x78] sm:$0xff]
    %v34 = vld [vmem:[%s0 + $0x80] sm:$0xff]
    %v35 = vld [vmem:[%s0 + $0x88] sm:$0xff]
    %v36 = vld [vmem:[%s0 + $0x90] sm:$0xff]
    %v37 = vld [vmem:[%s0 + $0x98] sm:$0xff]
    %v38 = vld [vmem:[%s0 + $0xa0] sm:$0xff]
    %v39 = vld [vmem:[%s0 + $0xa8] sm:$0xff]
    %v40 = vld [vmem:[%s0 + $0xb0] sm:$0xff]
    %v41 = vld [vmem:[%s0 + $0xb8] sm:$0xff]
    %v42 = vld [vmem:[%s0 + $0xc0] sm:$0xff]
    %v43 = vld [vmem:[%s0 + $0xc8] sm:$0xff]
    %v44 = vld [vmem:[%s0 + $0xd0] sm:$0xff]
    %v45 = vld [vmem:[%s0 + $0xd8] sm:$0xff]
    %v46 = vld [vmem:[%s0 + $0xe0] sm:$0xff]
    %v47 = vld [vmem:[%s0 + $0xe8] sm:$0xff]
    %v48 = vld [vmem:[%s0 + $0xf0] sm:$0xff]
    %v49 = vld [vmem:[%s0 + $0xf8] sm:$0xff]
    %v50 = vld [vmem:[%s1] sm:$0xff]
    %v51 = vld [vmem:[%s1 + $0x8] sm:$0xff]
    %v52 = vld [vmem:[%s1 + $0x10] sm:$0xff]
    %v53 = vld [vmem:[%s1 + $0x18] sm:$0xff]
    %v54 = vld [vmem:[%s1 + $0x20] sm:$0x1f]
    %vm55 = vcmask 302080
    %v57 = vsel %vm55, %v18, 0
    %v60 = vsel %vm55, %v19, 0
    %v63 = vsel %vm55, %v20, 0
    %v66 = vsel %vm55, %v21, 0
    %v69 = vsel %vm55, %v22, 0
    %v72 = vsel %vm55, %v23, 0
    %v75 = vsel %vm55, %v24, 0
    %v78 = vsel %vm55, %v25, 0
    %v81 = vsel %vm55, %v26, 0
    %v84 = vsel %vm55, %v27, 0
    %v87 = vsel %vm55, %v28, 0
    %v90 = vsel %vm55, %v29, 0
    %v93 = vsel %vm55, %v30, 0
    %v96 = vsel %vm55, %v31, 0
    %v99 = vsel %vm55, %v32, 0
    %v102 = vsel %vm55, %v33, 0
    %v105 = vsel %vm55, %v34, 0
    %v108 = vsel %vm55, %v35, 0
    %v111 = vsel %vm55, %v36, 0
    %v114 = vsel %vm55, %v37, 0
    %v117 = vsel %vm55, %v38, 0
    %v120 = vsel %vm55, %v39, 0
    %v123 = vsel %vm55, %v40, 0
    %v126 = vsel %vm55, %v41, 0
    %v129 = vsel %vm55, %v42, 0
    %v132 = vsel %vm55, %v43, 0
    %v135 = vsel %vm55, %v44, 0
    %v138 = vsel %vm55, %v45, 0
    %v141 = vsel %vm55, %v46, 0
    %v144 = vsel %vm55, %v47, 0
    %v147 = vsel %vm55, %v48, 0
    %v150 = vsel %vm55, %v49, 0
    %vm152 = vcmask 1044480
    %v154 = vsel %vm152, %v54, 0
    %156 = vmatpush.msra.mxu0 0.0
    %157 = vmatpush.msra.mxu0 0.0
    %158 = vmatpush.msra.mxu0 0.0
    %159 = vmatpush.msra.mxu0 0.0
    %160 = vmatpush.msra.mxu0 0.0
    %161 = vmatpush.msra.mxu0 0.0
    %162 = vmatpush.msra.mxu0 0.0
    %163 = vmatpush.msra.mxu0 0.0
    %164 = vmatpush.msra.mxu0 0.0
    %165 = vmatpush.msra.mxu0 0.0
    %166 = vmatpush.msra.mxu0 0.0
    %167 = vmatpush.msra.mxu0 %v154
    %168 = vmatpush.msra.mxu0 %v53
    %169 = vmatpush.msra.mxu0 %v52
    %170 = vmatpush.msra.mxu0 %v51
    %171 = vmatpush.msra.mxu0 %v50
    %172 = vmatmul.f32.gmra.mxu0 %v57
    %v173 = vpop.f32.mrf.mxu0
    %v174 = vadd.f32 0.0, %v173
    %175 = vmatmul.f32.gmra.mxu0 %v60
    %v176 = vpop.f32.mrf.mxu0
    %v177 = vadd.f32 0.0, %v176
    %178 = vmatmul.f32.gmra.mxu0 %v63
    %v179 = vpop.f32.mrf.mxu0
    %v180 = vadd.f32 0.0, %v179
    %181 = vmatmul.f32.gmra.mxu0 %v66
    %v182 = vpop.f32.mrf.mxu0
    %v183 = vadd.f32 0.0, %v182
    %184 = vmatmul.f32.gmra.mxu0 %v69
    %v185 = vpop.f32.mrf.mxu0
    %v186 = vadd.f32 0.0, %v185
    %187 = vmatmul.f32.gmra.mxu0 %v72
    %v188 = vpop.f32.mrf.mxu0
    %v189 = vadd.f32 0.0, %v188
    %190 = vmatmul.f32.gmra.mxu0 %v75
    %v191 = vpop.f32.mrf.mxu0
    %v192 = vadd.f32 0.0, %v191
    %193 = vmatmul.f32.gmra.mxu0 %v78
    %v194 = vpop.f32.mrf.mxu0
    %v195 = vadd.f32 0.0, %v194
    %196 = vmatmul.f32.gmra.mxu0 %v81
    %v197 = vpop.f32.mrf.mxu0
    %v198 = vadd.f32 0.0, %v197
    %199 = vmatmul.f32.gmra.mxu0 %v84
    %v200 = vpop.f32.mrf.mxu0
    %v201 = vadd.f32 0.0, %v200
    %202 = vmatmul.f32.gmra.mxu0 %v87
    %v203 = vpop.f32.mrf.mxu0
    %v204 = vadd.f32 0.0, %v203
    %205 = vmatmul.f32.gmra.mxu0 %v90
    %v206 = vpop.f32.mrf.mxu0
    %v207 = vadd.f32 0.0, %v206
    %208 = vmatmul.f32.gmra.mxu0 %v93
    %v209 = vpop.f32.mrf.mxu0
    %v210 = vadd.f32 0.0, %v209
    %211 = vmatmul.f32.gmra.mxu0 %v96
    %v212 = vpop.f32.mrf.mxu0
    %v213 = vadd.f32 0.0, %v212
    %214 = vmatmul.f32.gmra.mxu0 %v99
    %v215 = vpop.f32.mrf.mxu0
    %v216 = vadd.f32 0.0, %v215
    %217 = vmatmul.f32.gmra.mxu0 %v102
    %v218 = vpop.f32.mrf.mxu0
    %v219 = vadd.f32 0.0, %v218
    %220 = vmatmul.f32.gmra.mxu0 %v105
    %v221 = vpop.f32.mrf.mxu0
    %v222 = vadd.f32 0.0, %v221
    %223 = vmatmul.f32.gmra.mxu0 %v108
    %v224 = vpop.f32.mrf.mxu0
    %v225 = vadd.f32 0.0, %v224
    %226 = vmatmul.f32.gmra.mxu0 %v111
    %v227 = vpop.f32.mrf.mxu0
    %v228 = vadd.f32 0.0, %v227
    %229 = vmatmul.f32.gmra.mxu0 %v114
    %v230 = vpop.f32.mrf.mxu0
    %v231 = vadd.f32 0.0, %v230
    %232 = vmatmul.f32.gmra.mxu0 %v117
    %v233 = vpop.f32.mrf.mxu0
    %v234 = vadd.f32 0.0, %v233
    %235 = vmatmul.f32.gmra.mxu0 %v120
    %v236 = vpop.f32.mrf.mxu0
    %v237 = vadd.f32 0.0, %v236
    %238 = vmatmul.f32.gmra.mxu0 %v123
    %v239 = vpop.f32.mrf.mxu0
    %v240 = vadd.f32 0.0, %v239
    %241 = vmatmul.f32.gmra.mxu0 %v126
    %v242 = vpop.f32.mrf.mxu0
    %v243 = vadd.f32 0.0, %v242
    %244 = vmatmul.f32.gmra.mxu0 %v129
    %v245 = vpop.f32.mrf.mxu0
    %v246 = vadd.f32 0.0, %v245
    %247 = vmatmul.f32.gmra.mxu0 %v132
    %v248 = vpop.f32.mrf.mxu0
    %v249 = vadd.f32 0.0, %v248
    %250 = vmatmul.f32.gmra.mxu0 %v135
    %v251 = vpop.f32.mrf.mxu0
    %v252 = vadd.f32 0.0, %v251
    %253 = vmatmul.f32.gmra.mxu0 %v138
    %v254 = vpop.f32.mrf.mxu0
    %v255 = vadd.f32 0.0, %v254
    %256 = vmatmul.f32.gmra.mxu0 %v141
    %v257 = vpop.f32.mrf.mxu0
    %v258 = vadd.f32 0.0, %v257
    %259 = vmatmul.f32.gmra.mxu0 %v144
    %v260 = vpop.f32.mrf.mxu0
    %v261 = vadd.f32 0.0, %v260
    %262 = vmatmul.f32.gmra.mxu0 %v147
    %v263 = vpop.f32.mrf.mxu0
    %v264 = vadd.f32 0.0, %v263
    %265 = vmatmul.f32.gmra.mxu0 %v150
    %v266 = vpop.f32.mrf.mxu0
    %v267 = vadd.f32 0.0, %v266
    %268 = vdwg.mxu0
    %v269 = vmax.f32 %v174, %v186
    %v270 = vmax.f32 %v177, %v189
    %v271 = vmax.f32 %v180, %v192
    %v272 = vmax.f32 %v183, %v195
    %v273 = vmax.f32 %v269, %v198
    %v274 = vmax.f32 %v270, %v201
    %v275 = vmax.f32 %v271, %v204
    %v276 = vmax.f32 %v272, %v207
    %v277 = vmax.f32 %v273, %v210
    %v278 = vmax.f32 %v274, %v213
    %v279 = vmax.f32 %v275, %v216
    %v280 = vmax.f32 %v276, %v219
    %v281 = vmax.f32 %v277, %v222
    %v282 = vmax.f32 %v278, %v225
    %v283 = vmax.f32 %v279, %v228
    %v284 = vmax.f32 %v280, %v231
    %v285 = vmax.f32 %v281, %v234
    %v286 = vmax.f32 %v282, %v237
    %v287 = vmax.f32 %v283, %v240
    %v288 = vmax.f32 %v284, %v243
    %v289 = vmax.f32 %v285, %v246
    %v290 = vmax.f32 %v286, %v249
    %v291 = vmax.f32 %v287, %v252
    %v292 = vmax.f32 %v288, %v255
    %v293 = vmax.f32 %v289, %v258
    %v294 = vmax.f32 %v290, %v261
    %v295 = vmax.f32 %v291, %v264
    %v296 = vmax.f32 %v292, %v267
    %v297 = vmax.f32 %v293, %v294
    %v298 = vmax.f32 %v295, %v296
    %v299 = vmax.f32 %v297, %v298
    %v300 = vrot.slane %v299, 4
    %v301 = vmax.f32 %v299, %v300
    %v302 = vrot.slane %v301, 2
    %v303 = vmax.f32 %v301, %v302
    %v304 = vrot.slane %v303, 1
    %v305 = vmax.f32 %v303, %v304
    %v306 = vlaneseq
    %v307 = vshrl.u32 %v306, 7
    %v308 = vadd.s32 %v307, 8
    %v309 = vadd.s32 %v307, 16
    %v310 = vadd.s32 %v307, 24
    %v311 = vadd.s32 %v307, 32
    %v312 = vadd.s32 %v307, 40
    %v313 = vadd.s32 %v307, 48
    %v314 = vadd.s32 %v307, 56
    %v315 = vadd.s32 %v307, 64
    %v316 = vadd.s32 %v307, 72
    %v317 = vadd.s32 %v307, 80
    %v318 = vadd.s32 %v307, 88
    %v319 = vadd.s32 %v307, 96
    %v320 = vadd.s32 %v307, 104
    %v321 = vadd.s32 %v307, 112
    %v322 = vadd.s32 %v307, 120
    %v323 = vadd.s32 %v307, 128
    %v324 = vadd.s32 %v307, 136
    %v325 = vadd.s32 %v307, 144
    %v326 = vadd.s32 %v307, 152
    %v327 = vadd.s32 %v307, 160
    %v328 = vadd.s32 %v307, 168
    %v329 = vadd.s32 %v307, 176
    %v330 = vadd.s32 %v307, 184
    %v331 = vadd.s32 %v307, 192
    %v332 = vadd.s32 %v307, 200
    %v333 = vadd.s32 %v307, 208
    %v334 = vadd.s32 %v307, 216
    %v335 = vadd.s32 %v307, 224
    %v336 = vadd.s32 %v307, 232
    %v337 = vadd.s32 %v307, 240
    %v338 = vadd.s32 %v307, 248
    %s339 = smul.u32 0, 256
    %v340 = vstv %s339
    %v341 = vadd.s32 %v307, %v340
    %v342 = vadd.s32 %v308, %v340
    %v343 = vadd.s32 %v309, %v340
    %v344 = vadd.s32 %v310, %v340
    %v345 = vadd.s32 %v311, %v340
    %v346 = vadd.s32 %v312, %v340
    %v347 = vadd.s32 %v313, %v340
    %v348 = vadd.s32 %v314, %v340
    %v349 = vadd.s32 %v315, %v340
    %v350 = vadd.s32 %v316, %v340
    %v351 = vadd.s32 %v317, %v340
    %v352 = vadd.s32 %v318, %v340
    %v353 = vadd.s32 %v319, %v340
    %v354 = vadd.s32 %v320, %v340
    %v355 = vadd.s32 %v321, %v340
    %v356 = vadd.s32 %v322, %v340
    %v357 = vadd.s32 %v323, %v340
    %v358 = vadd.s32 %v324, %v340
    %v359 = vadd.s32 %v325, %v340
    %v360 = vadd.s32 %v326, %v340
    %v361 = vadd.s32 %v327, %v340
    %v362 = vadd.s32 %v328, %v340
    %v363 = vadd.s32 %v329, %v340
    %v364 = vadd.s32 %v330, %v340
    %v365 = vadd.s32 %v331, %v340
    %v366 = vadd.s32 %v332, %v340
    %v367 = vadd.s32 %v333, %v340
    %v368 = vadd.s32 %v334, %v340
    %v369 = vadd.s32 %v335, %v340
    %v370 = vadd.s32 %v336, %v340
    %v371 = vadd.s32 %v337, %v340
    %v372 = vadd.s32 %v338, %v340
    %vm373 = vcmp.ge.f32.partialorder %v174, %v305
    %vm374 = vcmp.ge.f32.partialorder %v177, %v305
    %vm375 = vcmp.ge.f32.partialorder %v180, %v305
    %vm376 = vcmp.ge.f32.partialorder %v183, %v305
    %vm377 = vcmp.ge.f32.partialorder %v186, %v305
    %vm378 = vcmp.ge.f32.partialorder %v189, %v305
    %vm379 = vcmp.ge.f32.partialorder %v192, %v305
    %vm380 = vcmp.ge.f32.partialorder %v195, %v305
    %vm381 = vcmp.ge.f32.partialorder %v198, %v305
    %vm382 = vcmp.ge.f32.partialorder %v201, %v305
    %vm383 = vcmp.ge.f32.partialorder %v204, %v305
    %vm384 = vcmp.ge.f32.partialorder %v207, %v305
    %vm385 = vcmp.ge.f32.partialorder %v210, %v305
    %vm386 = vcmp.ge.f32.partialorder %v213, %v305
    %vm387 = vcmp.ge.f32.partialorder %v216, %v305
    %vm388 = vcmp.ge.f32.partialorder %v219, %v305
    %vm389 = vcmp.ge.f32.partialorder %v222, %v305
    %vm390 = vcmp.ge.f32.partialorder %v225, %v305
    %vm391 = vcmp.ge.f32.partialorder %v228, %v305
    %vm392 = vcmp.ge.f32.partialorder %v231, %v305
    %vm393 = vcmp.ge.f32.partialorder %v234, %v305
    %vm394 = vcmp.ge.f32.partialorder %v237, %v305
    %vm395 = vcmp.ge.f32.partialorder %v240, %v305
    %vm396 = vcmp.ge.f32.partialorder %v243, %v305
    %vm397 = vcmp.ge.f32.partialorder %v246, %v305
    %vm398 = vcmp.ge.f32.partialorder %v249, %v305
    %vm399 = vcmp.ge.f32.partialorder %v252, %v305
    %vm400 = vcmp.ge.f32.partialorder %v255, %v305
    %vm401 = vcmp.ge.f32.partialorder %v258, %v305
    %vm402 = vcmp.ge.f32.partialorder %v261, %v305
    %vm403 = vcmp.ge.f32.partialorder %v264, %v305
    %vm404 = vcmp.ge.f32.partialorder %v267, %v305
    %v405 = vsel %vm373, %v341, 2147483647
    %v406 = vsel %vm374, %v342, 2147483647
    %v407 = vsel %vm375, %v343, 2147483647
    %v408 = vsel %vm376, %v344, 2147483647
    %v409 = vsel %vm377, %v345, 2147483647
    %v410 = vsel %vm378, %v346, 2147483647
    %v411 = vsel %vm379, %v347, 2147483647
    %v412 = vsel %vm380, %v348, 2147483647
    %v413 = vsel %vm381, %v349, 2147483647
    %v414 = vsel %vm382, %v350, 2147483647
    %v415 = vsel %vm383, %v351, 2147483647
    %v416 = vsel %vm384, %v352, 2147483647
    %v417 = vsel %vm385, %v353, 2147483647
    %v418 = vsel %vm386, %v354, 2147483647
    %v419 = vsel %vm387, %v355, 2147483647
    %v420 = vsel %vm388, %v356, 2147483647
    %v421 = vsel %vm389, %v357, 2147483647
    %v422 = vsel %vm390, %v358, 2147483647
    %v423 = vsel %vm391, %v359, 2147483647
    %v424 = vsel %vm392, %v360, 2147483647
    %v425 = vsel %vm393, %v361, 2147483647
    %v426 = vsel %vm394, %v362, 2147483647
    %v427 = vsel %vm395, %v363, 2147483647
    %v428 = vsel %vm396, %v364, 2147483647
    %v429 = vsel %vm397, %v365, 2147483647
    %v430 = vsel %vm398, %v366, 2147483647
    %v431 = vsel %vm399, %v367, 2147483647
    %v432 = vsel %vm400, %v368, 2147483647
    %v433 = vsel %vm401, %v369, 2147483647
    %v434 = vsel %vm402, %v370, 2147483647
    %v435 = vsel %vm403, %v371, 2147483647
    %v436 = vsel %vm404, %v372, 2147483647
    %vm437 = vcmp.lt.s32.totalorder %v405, %v409
    %v438 = vsel %vm437, %v405, %v409
    %vm439 = vcmp.lt.s32.totalorder %v406, %v410
    %v440 = vsel %vm439, %v406, %v410
    %vm441 = vcmp.lt.s32.totalorder %v407, %v411
    %v442 = vsel %vm441, %v407, %v411
    %vm443 = vcmp.lt.s32.totalorder %v408, %v412
    %v444 = vsel %vm443, %v408, %v412
    %vm445 = vcmp.lt.s32.totalorder %v438, %v413
    %v446 = vsel %vm445, %v438, %v413
    %vm447 = vcmp.lt.s32.totalorder %v440, %v414
    %v448 = vsel %vm447, %v440, %v414
    %vm449 = vcmp.lt.s32.totalorder %v442, %v415
    %v450 = vsel %vm449, %v442, %v415
    %vm451 = vcmp.lt.s32.totalorder %v444, %v416
    %v452 = vsel %vm451, %v444, %v416
    %vm453 = vcmp.lt.s32.totalorder %v446, %v417
    %v454 = vsel %vm453, %v446, %v417
    %vm455 = vcmp.lt.s32.totalorder %v448, %v418
    %v456 = vsel %vm455, %v448, %v418
    %vm457 = vcmp.lt.s32.totalorder %v450, %v419
    %v458 = vsel %vm457, %v450, %v419
    %vm459 = vcmp.lt.s32.totalorder %v452, %v420
    %v460 = vsel %vm459, %v452, %v420
    %vm461 = vcmp.lt.s32.totalorder %v454, %v421
    %v462 = vsel %vm461, %v454, %v421
    %vm463 = vcmp.lt.s32.totalorder %v456, %v422
    %v464 = vsel %vm463, %v456, %v422
    %vm465 = vcmp.lt.s32.totalorder %v458, %v423
    %v466 = vsel %vm465, %v458, %v423
    %vm467 = vcmp.lt.s32.totalorder %v460, %v424
    %v468 = vsel %vm467, %v460, %v424
    %vm469 = vcmp.lt.s32.totalorder %v462, %v425
    %v470 = vsel %vm469, %v462, %v425
    %vm471 = vcmp.lt.s32.totalorder %v464, %v426
    %v472 = vsel %vm471, %v464, %v426
    %vm473 = vcmp.lt.s32.totalorder %v466, %v427
    %v474 = vsel %vm473, %v466, %v427
    %vm475 = vcmp.lt.s32.totalorder %v468, %v428
    %v476 = vsel %vm475, %v468, %v428
    %vm477 = vcmp.lt.s32.totalorder %v470, %v429
    %v478 = vsel %vm477, %v470, %v429
    %vm479 = vcmp.lt.s32.totalorder %v472, %v430
    %v480 = vsel %vm479, %v472, %v430
    %vm481 = vcmp.lt.s32.totalorder %v474, %v431
    %v482 = vsel %vm481, %v474, %v431
    %vm483 = vcmp.lt.s32.totalorder %v476, %v432
    %v484 = vsel %vm483, %v476, %v432
    %vm485 = vcmp.lt.s32.totalorder %v478, %v433
    %v486 = vsel %vm485, %v478, %v433
    %vm487 = vcmp.lt.s32.totalorder %v480, %v434
    %v488 = vsel %vm487, %v480, %v434
    %vm489 = vcmp.lt.s32.totalorder %v482, %v435
    %v490 = vsel %vm489, %v482, %v435
    %vm491 = vcmp.lt.s32.totalorder %v484, %v436
    %v492 = vsel %vm491, %v484, %v436
    %vm493 = vcmp.lt.s32.totalorder %v486, %v488
    %v494 = vsel %vm493, %v486, %v488
    %vm495 = vcmp.lt.s32.totalorder %v490, %v492
    %v496 = vsel %vm495, %v490, %v492
    %vm497 = vcmp.lt.s32.totalorder %v494, %v496
    %v498 = vsel %vm497, %v494, %v496
    %v499 = vrot.slane %v498, 4
    %vm500 = vcmp.lt.s32.totalorder %v498, %v499
    %v501 = vsel %vm500, %v498, %v499
    %v502 = vrot.slane %v501, 2
    %vm503 = vcmp.lt.s32.totalorder %v501, %v502
    %v504 = vsel %vm503, %v501, %v502
    %v505 = vrot.slane %v504, 1
    %vm506 = vcmp.lt.s32.totalorder %v504, %v505
    %v507 = vsel %vm506, %v504, %v505
    %v508 = vld [vmem:[#allocation2] sm:$0x1]
    %vm509 = vcmp.gt.f32.partialorder %v305, %v508
    %v510 = vld [vmem:[#allocation3] sm:$0x1]
    %v511 = vsel %vm509, %v507, %v510
    %512 = vst [vmem:[#allocation3] sm:$0x1] %v511
    %v513 = vld [vmem:[#allocation2] sm:$0x1]
    %v514 = vsel %vm509, %v305, %v513
    %515 = vst [vmem:[#allocation2] sm:$0x1] %v514
    // Predicated region
    $region14: #{tpu_custom_call.1} parent=1 // pred_check
      _
    $region15: #{tpu_custom_call.1} parent=1 // pred_check_branch
      %517 = sbr.rel (0) target = $region17
    $region16: #{tpu_custom_call.1} parent=1 // pred_region
      %519 = vsyncadd [#allocation4], 0
      %s521 = sshll.u32 [#allocation3], 4
      %s522 = int_to_ptr.vmem [resolvable:$true] %s521
      %s523 = sshll.u32 %s2, 4
      %s524 = int_to_ptr.hbm [resolvable:$true] %s523
      %526 = dma.vmem_to_hbm [thread:$0]  %s522, 16, %s524, [#allocation4]
    $region17: #{tpu_custom_call.1} parent=1 // pred_fallthru
      _
    // Predicated region
    $region18: #{tpu_custom_call.1} parent=1 // pred_check
      _
    $region19: #{tpu_custom_call.1} parent=1 // pred_check_branch
      %528 = sbr.rel (0) target = $region21
    $region20: #{tpu_custom_call.1} parent=1 // pred_region
      %530 = dma.done [#allocation4], 16
    $region21: #{tpu_custom_call.1} parent=1 // pred_fallthru
      _
    %531 = vsyncpa [#allocation4], 1

</llo_original>
